<compile_context>
chip_gen: v5e
topology: v5e:2x2
jax: 0.10.0
libtpu: 0.0.40
codegen_flags: <defaults>
</compile_context>

<pallas_src>
import functools
import math

import jax
import jax.numpy as jnp
from jax.experimental import pallas as pl
from jax.experimental.pallas import tpu as pltpu


# ----------------------------------------------------------------------------
# Tiled linear layer: y = x @ W + b   (used for QKV projection and out proj)
# ----------------------------------------------------------------------------
def _linear_kernel(x_ref, w_ref, b_ref, o_ref):
    o_ref[...] = (
        jnp.dot(x_ref[...], w_ref[...], preferred_element_type=jnp.float32)
        + b_ref[...]
    ).astype(o_ref.dtype)


def _linear(x, w, b, *, out_dtype, row_tile):
    B, T, c_in = x.shape
    c_out = w.shape[1]
    assert T % row_tile == 0
    return pl.pallas_call(
        _linear_kernel,
        out_shape=jax.ShapeDtypeStruct((B, T, c_out), out_dtype),
        grid_spec=pltpu.PrefetchScalarGridSpec(
            num_scalar_prefetch=0,
            grid=(B, T // row_tile),
            in_specs=[
                pl.BlockSpec((None, row_tile, c_in), lambda b, t: (b, t, 0)),
                # Weights / bias: constant index map -> fetched once; single
                # buffered so they are not pointlessly double-buffered.
                pl.BlockSpec((c_in, c_out), lambda b, t: (0, 0),
                             pipeline_mode=pl.Buffered(1)),
                pl.BlockSpec((1, c_out), lambda b, t: (0, 0),
                             pipeline_mode=pl.Buffered(1)),
            ],
            out_specs=pl.BlockSpec((None, row_tile, c_out),
                                   lambda b, t: (b, t, 0)),
        ),
        compiler_params=pltpu.CompilerParams(
            dimension_semantics=("parallel", "parallel"),
            vmem_limit_bytes=48 * 1024 * 1024,
        ),
    )(x, w, b)


# ----------------------------------------------------------------------------
# Flash attention: grid (B, H, q_tiles, kv_tiles), online softmax in scratch.
# ----------------------------------------------------------------------------
def _flash_kernel(q_ref, k_ref, v_ref, o_ref, m_sc, l_sc, acc_sc, *, scale):
    tq = q_ref.shape[0]
    tkv = k_ref.shape[0]
    qi = pl.program_id(2)
    ki = pl.program_id(3)
    q0 = qi * tq
    k0 = ki * tkv

    @pl.when(ki == 0)
    def _init():
        m_sc[...] = jnp.full_like(m_sc, -jnp.inf)
        l_sc[...] = jnp.zeros_like(l_sc)
        acc_sc[...] = jnp.zeros_like(acc_sc)

    # Causal tile skipping: KV tiles entirely above the diagonal contribute
    # nothing -> skip their MXU + softmax work entirely.
    @pl.when(k0 <= q0 + tq - 1)
    def _update():
        q = q_ref[...]                                   # (tq, hd)  bf16
        k = k_ref[...]                                   # (tkv, hd) bf16
        # q @ k^T via dot_general (no materialized transpose), f32 accumulate.
        s = jax.lax.dot_general(
            q, k, (((1,), (1,)), ((), ())),
            preferred_element_type=jnp.float32) * scale  # (tq, tkv) f32

        # Causal mask (same -1e10 fill value as the PyTorch module).
        rows = q0 + jax.lax.broadcasted_iota(jnp.int32, (tq, tkv), 0)
        cols = k0 + jax.lax.broadcasted_iota(jnp.int32, (tq, tkv), 1)
        s = jnp.where(cols <= rows, s, jnp.float32(-1e10))

        m_prev = m_sc[...]
        m_new = jnp.maximum(m_prev, jnp.max(s, axis=-1, keepdims=True))
        alpha = jnp.exp(m_prev - m_new)
        p = jnp.exp(s - m_new)                           # f32
        l_sc[...] = alpha * l_sc[...] + jnp.sum(p, axis=-1, keepdims=True)
        acc_sc[...] = alpha * acc_sc[...] + jnp.dot(
            p.astype(jnp.bfloat16), v_ref[...],
            preferred_element_type=jnp.float32)
        m_sc[...] = m_new

    @pl.when(ki == pl.num_programs(3) - 1)
    def _finalize():
        o_ref[...] = (
            acc_sc[...] * pl.reciprocal(l_sc[...], approx=True)
        ).astype(o_ref.dtype)


def _flash_attention(q, k, v, *, q_tile, kv_tile, scale):
    B, H, T, hd = q.shape
    assert T % q_tile == 0 and T % kv_tile == 0
    kernel = functools.partial(_flash_kernel, scale=scale)
    return pl.pallas_call(
        kernel,
        out_shape=jax.ShapeDtypeStruct((B, H, T, hd), jnp.bfloat16),
        grid_spec=pltpu.PrefetchScalarGridSpec(
            num_scalar_prefetch=0,
            grid=(B, H, T // q_tile, T // kv_tile),
            in_specs=[
                pl.BlockSpec((None, None, q_tile, hd),
                             lambda b, h, qi, ki: (b, h, qi, 0)),
                pl.BlockSpec((None, None, kv_tile, hd),
                             lambda b, h, qi, ki: (b, h, ki, 0)),
                pl.BlockSpec((None, None, kv_tile, hd),
                             lambda b, h, qi, ki: (b, h, ki, 0)),
            ],
            out_specs=pl.BlockSpec((None, None, q_tile, hd),
                                   lambda b, h, qi, ki: (b, h, qi, 0)),
            scratch_shapes=[
                pltpu.VMEM((q_tile, 1), jnp.float32),    # running max
                pltpu.VMEM((q_tile, 1), jnp.float32),    # running sum
                pltpu.VMEM((q_tile, hd), jnp.float32),   # output accumulator
            ],
        ),
        compiler_params=pltpu.CompilerParams(
            dimension_semantics=("parallel", "parallel", "parallel", "arbitrary"),
            vmem_limit_bytes=48 * 1024 * 1024,
        ),
    )(q, k, v)


# ----------------------------------------------------------------------------
# Wrapper
# ----------------------------------------------------------------------------
def _round_up(x, m):
    return (x + m - 1) // m * m


def _choose_tile(T, target):
    """Return (tile, padded_T).  Bounded tile independent of T (no giant
    fallback tile); awkward T handled by padding to a tile multiple."""
    if T <= target:
        tile = _round_up(max(T, 8), 8)      # sublane-aligned single tile
        return tile, tile
    return target, _round_up(T, target)


def causal_self_attention(x, params, n_head, *, seq_tile=256):
    # seq_tile is the per-generation knob: 256 keeps score blocks and
    # pipeline buffers comfortably inside v7x's 64 MiB VMEM; on v6e/v5e
    # (128 MiB) seq_tile=512 amortizes per-grid-step overhead further.
    B, T, C = x.shape
    assert C % n_head == 0
    hd = C // n_head
    tile, Tp = _choose_tile(T, seq_tile)

    wq, bq = params["query"]
    wk, bk = params["key"]
    wv, bv = params["value"]
    wp, bp = params["proj"]

    # Fused QKV weight: one (C, 3C) contraction per token tile fills the MXU
    # and is computed exactly once (no per-query-tile K/V recompute).
    w_qkv = jnp.concatenate([wq, wk, wv], axis=1).astype(jnp.bfloat16)   # (C, 3C)
    b_qkv = jnp.concatenate([bq, bk, bv], axis=1).astype(jnp.float32)    # (1, 3C)

    x_p = x if Tp == T else jnp.pad(x, ((0, 0), (0, Tp - T), (0, 0)))
    x_bf = x_p.astype(jnp.bfloat16)

    # 1) QKV projection (Pallas); outputs bf16 immediately (no f32 copies live).
    qkv = _linear(x_bf, w_qkv, b_qkv, out_dtype=jnp.bfloat16, row_tile=tile)

    # 2) Head-major relayout for the attention kernel (cheap bf16 XLA transpose).
    q, k, v = jnp.split(qkv, 3, axis=-1)

    def head_major(z):                       # (B, Tp, C) -> (B, H, Tp, hd)
        return z.reshape(B, Tp, n_head, hd).transpose(0, 2, 1, 3)

    q_h, k_h, v_h = head_major(q), head_major(k), head_major(v)

    # 3) Flash attention with online softmax and causal tile skipping.
    y_h = _flash_attention(q_h, k_h, v_h, q_tile=tile, kv_tile=tile,
                           scale=1.0 / math.sqrt(hd))    # (B, H, Tp, hd) bf16

    # 4) Concat heads (layout only) + output projection; cross-head reduction
    #    happens for free inside the MXU f32 accumulator.
    y = y_h.transpose(0, 2, 1, 3).reshape(B, Tp, C)
    out = _linear(y, wp.astype(jnp.bfloat16), bp.astype(jnp.float32),
                  out_dtype=jnp.float32, row_tile=tile)

    return out if Tp == T else out[:, :T, :]


# ----------------------------------------------------------------------------
# Pure-JAX f32 reference (mirrors the PyTorch forward; dropout = identity)
# ----------------------------------------------------------------------------
def causal_self_attention_ref(x, params, n_head):
    B, T, C = x.shape
    hd = C // n_head

    def lin(z, wb):
        w, b = wb
        return z @ w + b[0]

    k = lin(x, params["key"]).reshape(B, T, n_head, hd).transpose(0, 2, 1, 3)
    q = lin(x, params["query"]).reshape(B, T, n_head, hd).transpose(0, 2, 1, 3)
    v = lin(x, params["value"]).reshape(B, T, n_head, hd).transpose(0, 2, 1, 3)

    att = jnp.einsum("bhqd,bhkd->bhqk", q, k) * (1.0 / math.sqrt(hd))
    mask = jnp.tril(jnp.ones((T, T)))[None, None]
    att = jnp.where(mask == 0, jnp.float32(-1e10), att)
    att = jax.nn.softmax(att, axis=-1)
    y = jnp.einsum("bhqk,bhkd->bhqd", att, v)
    y = y.transpose(0, 2, 1, 3).reshape(B, T, C)
    return lin(y, params["proj"])


# ----------------------------------------------------------------------------
# Deterministic init + run
# ----------------------------------------------------------------------------
def init_params(key, n_embd):
    params = {}
    names = ["key", "query", "value", "proj"]
    keys = jax.random.split(key, len(names))
    for name, k in zip(names, keys):
        kw, kb = jax.random.split(k)
        w = 0.02 * jax.random.normal(kw, (n_embd, n_embd), dtype=jnp.float32)
        b = 0.02 * jax.random.normal(kb, (1, n_embd), dtype=jnp.float32)
        params[name] = (w, b)
    return params


if __name__ == "__main__":
    # Small config: n_embd=32, n_head=4, block_size=8, batch=2.
    n_embd, n_head = 32, 4
    B, T = 2, 8

    root = jax.random.PRNGKey(0)
    k_params, k_x = jax.random.split(root)

    params = init_params(k_params, n_embd)
    x = jax.random.normal(k_x, (B, T, n_embd), dtype=jnp.float32)

    out = causal_self_attention(x, params, n_head)
    out = jax.block_until_ready(out)

    ref = causal_self_attention_ref(x, params, n_head)
    assert out.shape == (B, T, n_embd)
    # bf16 MXU operands / bf16 intermediates -> compare at bf16-level tolerance.
    err = float(jnp.max(jnp.abs(out - ref)))
    assert jnp.allclose(out, ref, atol=2e-2, rtol=2e-2), err

    print("KERNEL_OK")
</pallas_src>

<mosaic_0001>
module attributes {stable_mosaic.version = 11 : i64} {
  func.func @_linear_kernel(%arg0: i32, %arg1: i32, %arg2: memref<1x8x32xbf16, #tpu.memory_space<vmem>>, %arg3: memref<32x96xbf16, #tpu.memory_space<vmem>>, %arg4: memref<1x96xf32, #tpu.memory_space<vmem>>, %arg5: memref<1x8x96xbf16, #tpu.memory_space<vmem>>) attributes {dimension_semantics = [#tpu.dimension_semantics<parallel>, #tpu.dimension_semantics<parallel>], iteration_bounds = array<i64: 2, 1>, scalar_prefetch = 0 : i64, scratch_operands = 0 : i64, tpu.core_type = #tpu.core_type<tc>, window_params = [{transform_indices = @transform_0, window_bounds = array<i64: 1, 8, 32>}, {pipeline_mode = #tpu.pipeline_mode<synchronous>, transform_indices = @transform_1, window_bounds = array<i64: 32, 96>}, {pipeline_mode = #tpu.pipeline_mode<synchronous>, transform_indices = @transform_2, window_bounds = array<i64: 1, 96>}, {transform_indices = @transform_3, window_bounds = array<i64: 1, 8, 96>}]} {
    %c0 = arith.constant 0 : index
    %c0_0 = arith.constant 0 : index
    %c0_1 = arith.constant 0 : index
    %0 = vector.load %arg2[%c0, %c0_0, %c0_1] : memref<1x8x32xbf16, #tpu.memory_space<vmem>>, vector<1x8x32xbf16>
    %1 = vector.shape_cast %0 : vector<1x8x32xbf16> to vector<8x32xbf16>
    %c0_2 = arith.constant 0 : index
    %c0_3 = arith.constant 0 : index
    %2 = vector.load %arg3[%c0_2, %c0_3] : memref<32x96xbf16, #tpu.memory_space<vmem>>, vector<32x96xbf16>
    %cst = arith.constant dense<0.000000e+00> : vector<8x96xf32>
    %3 = tpu.matmul %1, %2, %cst {dimension_numbers = #tpu.dot_dimension_numbers<[1], [0], [0], [1], [0, 0, 1, 1], [], []>} : vector<8x32xbf16>, vector<32x96xbf16>, vector<8x96xf32> -> vector<8x96xf32>
    %c0_4 = arith.constant 0 : index
    %c0_5 = arith.constant 0 : index
    %4 = vector.load %arg4[%c0_4, %c0_5] : memref<1x96xf32, #tpu.memory_space<vmem>>, vector<1x96xf32>
    %5 = vector.broadcast %4 : vector<1x96xf32> to vector<8x96xf32>
    %6 = arith.addf %3, %5 : vector<8x96xf32>
    %7 = arith.truncf %6 : vector<8x96xf32> to vector<8x96xbf16>
    %c0_6 = arith.constant 0 : index
    %c0_7 = arith.constant 0 : index
    %c0_8 = arith.constant 0 : index
    %8 = vector.load %arg5[%c0_6, %c0_7, %c0_8] : memref<1x8x96xbf16, #tpu.memory_space<vmem>>, vector<1x8x96xbf16>
    %9 = vector.shape_cast %8 : vector<1x8x96xbf16> to vector<8x96xbf16>
    %10 = vector.shape_cast %7 : vector<8x96xbf16> to vector<1x8x96xbf16>
    tpu.vector_store %arg5[%c0_6, %c0_7, %c0_8], %10 {strides = array<i32>} : memref<1x8x96xbf16, #tpu.memory_space<vmem>>, vector<1x8x96xbf16>,
    return
  }
  func.func @transform_0(%arg0: i32, %arg1: i32) -> (i32, i32, i32) {
    %c0_i32 = arith.constant 0 : i32
    %c0_i32_0 = arith.constant 0 : i32
    return %arg0, %arg1, %c0_i32 : i32, i32, i32
  }
  func.func @transform_1(%arg0: i32, %arg1: i32) -> (i32, i32) {
    %c0_i32 = arith.constant 0 : i32
    %c0_i32_0 = arith.constant 0 : i32
    %c0_i32_1 = arith.constant 0 : i32
    return %c0_i32, %c0_i32_0 : i32, i32
  }
  func.func @transform_2(%arg0: i32, %arg1: i32) -> (i32, i32) {
    %c0_i32 = arith.constant 0 : i32
    %c0_i32_0 = arith.constant 0 : i32
    %c0_i32_1 = arith.constant 0 : i32
    return %c0_i32, %c0_i32_0 : i32, i32
  }
  func.func @transform_3(%arg0: i32, %arg1: i32) -> (i32, i32, i32) {
    %c0_i32 = arith.constant 0 : i32
    %c0_i32_0 = arith.constant 0 : i32
    return %arg0, %arg1, %c0_i32 : i32, i32, i32
  }
}

</mosaic_0001>

<llo_original>
// kernel: tpu_custom_call.1
$region0: #{tpu_custom_call.1}
  #allocation0 [shape = 'u32[]', space=smem, size = 0x4, offset = 0x4, fixed_abs, tag = 'smem constant byte address 0x4 - core index']
  #allocation1 [shape = 'u32[72,128]{1,0:T(1,128)}', space=vmem, size = 0x9000, scoped, tag = 'internal scratch']
  %s0 = inlined_call_operand.hbm [shape: bf16[2,8,32], index: 0, kind: input, shape index: {}]
  %s1 = inlined_call_operand.hbm [shape: bf16[32,96], index: 1, kind: input, shape index: {}]
  %s2 = inlined_call_operand.vmem [shape: f32[1,96], index: 2, kind: input, shape index: {}]
  %s3 = inlined_call_operand.hbm [shape: bf16[2,8,96], index: 3, kind: output, shape index: {}]
  %s4 = sld [smem:[#allocation0]]
  $region53: #{tpu_custom_call.1} parent=0
    _
  %s6 = ssub.s32 1, %s4
  %s7 = scalar_select 0, %s6, %s4
  $region1: #{tpu_custom_call.1} parent=0
    #allocation2 [shape = 'u8[4096]{0}', space=vmem, size = 0x1000, scoped, tag = 'input window, operand 0']
    #allocation3 [shape = 's32[2]{0}', space=sflag, size = 0x8, scoped, tag = 'scoped memory for tpu_custom_call.1']
    #allocation4 [shape = 's32[2]{0}', space=sflag, size = 0x8, scoped, tag = 'scoped memory for tpu_custom_call.1']
    #allocation5 [shape = 'u8[8192]{0}', space=vmem, size = 0x2000, scoped, tag = 'input window, operand 1, single buffered']
    #allocation6 [shape = 's32[1]{0}', space=sflag, size = 0x4, scoped, tag = 'scoped memory for tpu_custom_call.1']
    #allocation7 [shape = 'u8[4096]{0}', space=vmem, size = 0x1000, scoped, tag = 'output window, operand 0']
    %8 = vsyncpa [#allocation3], 0
    %s9 = scalar_lea.sflag [#allocation3], 1
    %10 = vsyncpa %s9, 0
    %11 = vsyncpa [#allocation6], 0
    %12 = vsyncpa [#allocation4], 0
    %s13 = scalar_lea.sflag [#allocation4], 1
    %14 = vsyncpa %s13, 0
    loop: start=0, step=1, limit=4
    $region2: #{tpu_custom_call.1} parent=1 // loop_pre_header
      _
    $region3: #{tpu_custom_call.1} parent=1 // loop_header
      %s16 = sphi 0, %s20
      %p17 = scmp.ge.s32.totalorder %s16, 4
      %s23 = sphi 0, %s35
      %s24 = sphi 0, %s31
      %s25 = sphi 0, %s23
      %s26 = sphi 0, %s24
      %s27 = sphi 0, %s25
      %s28 = sphi 0, %s26
      %s40 = sphi 0, %s42
      %s43 = sphi 0, %s40
      %s44 = sphi 0, %s43
      %s60 = sphi 0, %s44
      %s64 = sphi 0, %s64
      %s66 = sphi 0, %s64
      %s67 = sphi 0, %s66
      %s81 = sphi 0, %s67
      %s85 = sphi 0, %s85
      %s87 = sphi 0, %s85
      %s88 = sphi 0, %s87
      %s102 = sphi 0, %s88
      %s110 = sphi 0, %s112
      %s113 = sphi 0, %s110
      %s114 = sphi 0, %s113
      %s130 = sphi 0, %s114
    $region4: #{tpu_custom_call.1} parent=1 // loop_header_branch
      %19 = sbr.rel (%p17) target = $region8
    $region5: #{tpu_custom_call.1} parent=1 // loop_body
      %s21 = ssub.s32 %s16, 1
      %s22 = ssub.s32 %s16, 2
      %s29 = sadd.s32 1, %s24
      %p30 = scmp.ge.s32.totalorder %s29, 1
      %s31 = scalar_select %p30, 0, %s29
      %s32 = sadd.s32 1, %s23
      %s33 = scalar_select %p30, %s32, %s23
      %p34 = scmp.ge.s32.totalorder %s33, 2
      %s35 = scalar_select %p34, 0, %s33
      %s36 = ssub.s32 %s23, %s35
      %s37 = ssub.s32 %s24, %s31
      %s38 = sor.u32 %s36, %s37
      %p39 = scmp.eq.s32.totalorder %s38, 0
      %s41 = sadd.s32 %s40, 1
      %s42 = scalar_select %p39, %s40, %s41
      %p45 = pneg %p39
      %p46 = scmp.eq.s32.totalorder %s16, 1
      %p47 = por %p45, %p46
      %p48 = scmp.ne.s32.totalorder %s40, %s43
      %p49 = scmp.eq.s32.totalorder %s16, 0
      %p50 = por %p48, %p49
      %p51 = scmp.ne.s32.totalorder %s40, %s43
      %p52 = scmp.eq.s32.totalorder %s21, 1
      %p53 = por %p51, %p52
      %p54 = scmp.ne.s32.totalorder %s43, %s44
      %p55 = scmp.eq.s32.totalorder %s21, 0
      %p56 = por %p54, %p55
      %p57 = scmp.ne.s32.totalorder %s43, %s44
      %p58 = scmp.eq.s32.totalorder %s22, 1
      %p59 = por %p57, %p58
      %p61 = scmp.ne.s32.totalorder %s44, %s60
      %p62 = scmp.eq.s32.totalorder %s22, 0
      %p63 = por %p61, %p62
      %s65 = sadd.s32 %s64, 1
      %p68 = scmp.eq.s32.totalorder %s16, 1
      %p69 = scmp.ne.s32.totalorder %s64, %s66
      %p70 = scmp.eq.s32.totalorder %s16, 0
      %p71 = por %p69, %p70
      %p72 = scmp.ne.s32.totalorder %s64, %s66
      %p73 = scmp.eq.s32.totalorder %s21, 1
      %p74 = por %p72, %p73
      %p75 = scmp.ne.s32.totalorder %s66, %s67
      %p76 = scmp.eq.s32.totalorder %s21, 0
      %p77 = por %p75, %p76
      %p78 = scmp.ne.s32.totalorder %s66, %s67
      %p79 = scmp.eq.s32.totalorder %s22, 1
      %p80 = por %p78, %p79
      %p82 = scmp.ne.s32.totalorder %s67, %s81
      %p83 = scmp.eq.s32.totalorder %s22, 0
      %p84 = por %p82, %p83
      %s86 = sadd.s32 %s85, 1
      %p89 = scmp.eq.s32.totalorder %s16, 1
      %p90 = scmp.ne.s32.totalorder %s85, %s87
      %p91 = scmp.eq.s32.totalorder %s16, 0
      %p92 = por %p90, %p91
      %p93 = scmp.ne.s32.totalorder %s85, %s87
      %p94 = scmp.eq.s32.totalorder %s21, 1
      %p95 = por %p93, %p94
      %p96 = scmp.ne.s32.totalorder %s87, %s88
      %p97 = scmp.eq.s32.totalorder %s21, 0
      %p98 = por %p96, %p97
      %p99 = scmp.ne.s32.totalorder %s87, %s88
      %p100 = scmp.eq.s32.totalorder %s22, 1
      %p101 = por %p99, %p100
      %p103 = scmp.ne.s32.totalorder %s88, %s102
      %p104 = scmp.eq.s32.totalorder %s22, 0
      %p105 = por %p103, %p104
      %s106 = ssub.s32 %s23, %s35
      %s107 = ssub.s32 %s24, %s31
      %s108 = sor.u32 %s106, %s107
      %p109 = scmp.eq.s32.totalorder %s108, 0
      %s111 = sadd.s32 %s110, 1
      %s112 = scalar_select %p109, %s110, %s111
      %p115 = pneg %p109
      %p116 = scmp.eq.s32.totalorder %s16, 1
      %p117 = por %p115, %p116
      %p118 = scmp.ne.s32.totalorder %s110, %s113
      %p119 = scmp.eq.s32.totalorder %s16, 0
      %p120 = por %p118, %p119
      %p121 = scmp.ne.s32.totalorder %s110, %s113
      %p122 = scmp.eq.s32.totalorder %s21, 1
      %p123 = por %p121, %p122
      %p124 = scmp.ne.s32.totalorder %s113, %s114
      %p125 = scmp.eq.s32.totalorder %s21, 0
      %p126 = por %p124, %p125
      %p127 = scmp.ne.s32.totalorder %s113, %s114
      %p128 = scmp.eq.s32.totalorder %s22, 1
      %p129 = por %p127, %p128
      %p131 = scmp.ne.s32.totalorder %s114, %s130
      %p132 = scmp.eq.s32.totalorder %s22, 0
      %p133 = por %p131, %p132
      %p134 = scmp.le.s32.totalorder 1, %s16
      %p135 = scmp.lt.s32.totalorder %s16, 3
      %p136 = pnand %p134, %p135
      %p137 = pneg %p136
      // Predicated region
      $region9: #{tpu_custom_call.1} parent=5 // pred_check
        _
      $region10: #{tpu_custom_call.1} parent=5 // pred_check_branch
        %139 = sbr.rel (%p136) target = $region12
      $region11: #{tpu_custom_call.1} parent=5 // pred_region
        %s140 = ssub.s32 %s16, 1
        // Predicated region
        $region13: #{tpu_custom_call.1} parent=11 // pred_check
          %p141 = pneg %p77
        $region14: #{tpu_custom_call.1} parent=11 // pred_check_branch
          %143 = sbr.rel (%p141) target = $region16
        $region15: #{tpu_custom_call.1} parent=11 // pred_region
          %145 = vsyncadd [#allocation6], 0
          %s146 = sshll.u32 %s1, 4
          %s147 = int_to_ptr.hbm [resolvable:$true] %s146
          %s148 = sshll.u32 [#allocation5], 4
          %s149 = int_to_ptr.vmem [resolvable:$true] %s148
          %154 = dma.hbm_to_vmem [thread:$0]  %s147, 256, %s149, [#allocation6], 64, 64, 4
        $region16: #{tpu_custom_call.1} parent=11 // pred_fallthru
          _
        // Predicated region
        $region17: #{tpu_custom_call.1} parent=11 // pred_check
          %p155 = pneg %p98
        $region18: #{tpu_custom_call.1} parent=11 // pred_check_branch
          %157 = sbr.rel (%p155) target = $region20
        $region19: #{tpu_custom_call.1} parent=11 // pred_region
          _
        $region20: #{tpu_custom_call.1} parent=11 // pred_fallthru
          _
      $region12: #{tpu_custom_call.1} parent=5 // pred_fallthru
        _
      %p158 = scmp.lt.s32.totalorder %s16, 2
      // Predicated region
      $region21: #{tpu_custom_call.1} parent=5 // pred_check
        %p159 = pneg %p158
      $region22: #{tpu_custom_call.1} parent=5 // pred_check_branch
        %161 = sbr.rel (%p159) target = $region24
      $region23: #{tpu_custom_call.1} parent=5 // pred_region
        // Predicated region
        $region25: #{tpu_custom_call.1} parent=23 // pred_check
          %p162 = pneg %p50
        $region26: #{tpu_custom_call.1} parent=23 // pred_check_branch
          %164 = sbr.rel (%p162) target = $region28
        $region27: #{tpu_custom_call.1} parent=23 // pred_region
          %s165 = sand.u32 %s40, 1
          %s166 = scalar_lea.sflag [#allocation3], %s165
          %s167 = sand.u32 %s40, 1
          %s168 = smul.addr %s167, 4
          %s169 = scalar_lea.vmem [#allocation2], %s168
          %171 = vsyncadd %s166, 0
          %s172 = sadd.s32 %s24, %s23
          %s173 = smul.addr %s172, 4
          %s174 = scalar_lea.hbm %s0, %s173
          %s176 = sshll.u32 %s174, 4
          %s177 = int_to_ptr.hbm [resolvable:$true] %s176
          %s178 = sshll.u32 %s169, 4
          %s179 = int_to_ptr.vmem [resolvable:$true] %s178
          %181 = dma.hbm_to_vmem [thread:$0]  %s177, 64, %s179, %s166
        $region28: #{tpu_custom_call.1} parent=23 // pred_fallthru
          _
      $region24: #{tpu_custom_call.1} parent=5 // pred_fallthru
        _
      %p182 = scmp.le.s32.totalorder 1, %s16
      %p183 = scmp.lt.s32.totalorder %s16, 3
      %p184 = pnand %p182, %p183
      %p185 = pneg %p184
      // Predicated region
      $region29: #{tpu_custom_call.1} parent=5 // pred_check
        _
      $region30: #{tpu_custom_call.1} parent=5 // pred_check_branch
        %187 = sbr.rel (%p184) target = $region32
      $region31: #{tpu_custom_call.1} parent=5 // pred_region
        %s188 = ssub.s32 %s16, 1
        %s189 = sand.u32 %s43, 1
        %s190 = scalar_lea.sflag [#allocation3], %s189
        %s191 = sand.u32 %s43, 1
        %s192 = smul.addr %s191, 4
        %s193 = scalar_lea.vmem [#allocation2], %s192
        // Predicated region
        $region33: #{tpu_custom_call.1} parent=31 // pred_check
          %p194 = pneg %p56
        $region34: #{tpu_custom_call.1} parent=31 // pred_check_branch
          %196 = sbr.rel (%p194) target = $region36
        $region35: #{tpu_custom_call.1} parent=31 // pred_region
          %198 = dma.done %s190, 64
        $region36: #{tpu_custom_call.1} parent=31 // pred_fallthru
          _
        // Predicated region
        $region37: #{tpu_custom_call.1} parent=31 // pred_check
          %p199 = pneg %p77
        $region38: #{tpu_custom_call.1} parent=31 // pred_check_branch
          %201 = sbr.rel (%p199) target = $region40
        $region39: #{tpu_custom_call.1} parent=31 // pred_region
          %203 = dma.done [#allocation6], 256
        $region40: #{tpu_custom_call.1} parent=31 // pred_fallthru
          _
        %s204 = sand.u32 %s43, 1
        %s205 = scalar_lea.sflag [#allocation3], %s204
        %s206 = sand.u32 %s43, 1
        %s207 = smul.addr %s206, 4
        %s208 = scalar_lea.vmem [#allocation2], %s207
        %p209 = pneg %p56
        %p210 = pneg %p53
        %p211 = pneg %p77
        %p212 = pneg %p74
        %p213 = pneg %p98
        %p214 = pneg %p95
        %p215 = pneg %p126
        %p216 = pneg %p123
        %s217 = sand.u32 %s113, 1
        %s218 = scalar_lea.sflag [#allocation4], %s217
        %s219 = sand.u32 %s113, 1
        %s220 = smul.addr %s219, 4
        %s221 = scalar_lea.vmem [#allocation7], %s220
        %v223 = vld [vmem:[%s193] sm:$0xf]
        %v224 = vld [vmem:[#allocation5] sm:$0xf]
        %v225 = vld [vmem:[#allocation5 + $0x4] sm:$0xf]
        %v226 = vld [vmem:[#allocation5 + $0x8] sm:$0xf]
        %v227 = vld [vmem:[#allocation5 + $0xc] sm:$0xf]
        %v228 = vld [vmem:[%s2] sm:$0x1]
        %v230 = vperm.slane %v228, 0
        %v236 = vunpack.c.l.b16 %v224
        %v237 = vunpack.c.l.b16 %v225
        %v238 = vunpack.c.l.b16 %v226
        %v239 = vunpack.c.l.b16 %v227
        %v240 = vpack.c.b16 %v237, %v236
        %v241 = vpack.c.b16 %v239, %v238
        %vm244 = vcmask 261120
        %v246 = vsel %vm244, %v223, 0
        %248 = vmatpush.bf16.msra.mxu0 0
        %249 = vmatpush.bf16.msra.mxu0 0
        %250 = vmatpush.bf16.msra.mxu0 0
        %251 = vmatpush.bf16.msra.mxu0 0
        %252 = vmatpush.bf16.msra.mxu0 0
        %253 = vmatpush.bf16.msra.mxu0 0
        %254 = vmatpush.bf16.msra.mxu0 %v241
        %255 = vmatpush.bf16.msra.mxu0 %v240
        %256 = vmatmul.bf16.gmra.mxu0 %v246
        %v257 = vpop.f32.mrf.mxu0
        %v258 = vadd.f32 %v230, %v257
        %v259 = vpop.f32.mrf.mxu0
        %260 = vdwg.mxu0
        %v261 = vpack.c.bf16 %v258, %v258
        %vm262 = vcmask 781312
        %263 = vst.msk [vmem:[%s221] sm:$0xf] %vm262, %v261
        %s264 = sand.u32 %s113, 1
        %s265 = scalar_lea.sflag [#allocation4], %s264
        %s266 = sand.u32 %s113, 1
        %s267 = smul.addr %s266, 4
        %s268 = scalar_lea.vmem [#allocation7], %s267
        // Predicated region
        $region41: #{tpu_custom_call.1} parent=31 // pred_check
          %p269 = pneg %p123
        $region42: #{tpu_custom_call.1} parent=31 // pred_check_branch
          %271 = sbr.rel (%p269) target = $region44
        $region43: #{tpu_custom_call.1} parent=31 // pred_region
          %273 = vsyncadd %s265, 0
          %s274 = sadd.s32 %s26, %s25
          %s275 = smul.addr %s274, 4
          %s276 = scalar_lea.hbm %s3, %s275
          %s278 = sshll.u32 %s268, 4
          %s279 = int_to_ptr.vmem [resolvable:$true] %s278
          %s280 = sshll.u32 %s276, 4
          %s281 = int_to_ptr.hbm [resolvable:$true] %s280
          %283 = dma.vmem_to_hbm [thread:$0]  %s279, 64, %s281, %s265
        $region44: #{tpu_custom_call.1} parent=31 // pred_fallthru
          _
      $region32: #{tpu_custom_call.1} parent=5 // pred_fallthru
        _
      %p284 = scmp.le.s32.totalorder 2, %s16
      // Predicated region
      $region45: #{tpu_custom_call.1} parent=5 // pred_check
        %p285 = pneg %p284
      $region46: #{tpu_custom_call.1} parent=5 // pred_check_branch
        %287 = sbr.rel (%p285) target = $region48
      $region47: #{tpu_custom_call.1} parent=5 // pred_region
        %s288 = ssub.s32 %s16, 2
        // Predicated region
        $region49: #{tpu_custom_call.1} parent=47 // pred_check
          %p289 = pneg %p129
        $region50: #{tpu_custom_call.1} parent=47 // pred_check_branch
          %291 = sbr.rel (%p289) target = $region52
        $region51: #{tpu_custom_call.1} parent=47 // pred_region
          %s292 = sand.u32 %s114, 1
          %s293 = scalar_lea.sflag [#allocation4], %s292
          %s294 = sand.u32 %s114, 1
          %s295 = smul.addr %s294, 4
          %s296 = scalar_lea.vmem [#allocation7], %s295
          %298 = dma.done %s293, 64
        $region52: #{tpu_custom_call.1} parent=47 // pred_fallthru
          _
      $region48: #{tpu_custom_call.1} parent=5 // pred_fallthru
        _
    $region6: #{tpu_custom_call.1} parent=1 // loop_footer
      %s20 = sadd.s32 1, %s16
    $region7: #{tpu_custom_call.1} parent=1 // loop_footer_branch
      %15 = sbr.rel target = $region3
    $region8: #{tpu_custom_call.1} parent=1 // loop_exit
      _
    %299 = vsyncpa [#allocation3], 1
    %s300 = scalar_lea.sflag [#allocation3], 1
    %301 = vsyncpa %s300, 1
    %302 = vsyncpa [#allocation6], 1
    %303 = vsyncpa [#allocation4], 1
    %s304 = scalar_lea.sflag [#allocation4], 1
    %305 = vsyncpa %s304, 1

</llo_original>
